<compile_context>
chip_gen: v6e
topology: v6e:2x2x1
jax: 0.10.0
libtpu: 0.0.40
codegen_flags: <defaults>
</compile_context>

<pallas_src>
import functools

import jax
import jax.numpy as jnp
from jax.experimental import pallas as pl
from jax.experimental.pallas import tpu as pltpu


def _round_up(x, m):
    return ((x + m - 1) // m) * m


def _proj_kernel(p_ref, w_ref, add_ref, o_ref):
    # p_ref:   (tn, Kp)  patch rows for this tile (batch dim squeezed)
    # w_ref:   (Kp, E)   projection weight (constant block -> loaded once)
    # add_ref: (tn, E)   fused per-row additive term (conv bias + pos emb / cls)
    # o_ref:   (tn, E)
    acc = jnp.dot(p_ref[...], w_ref[...], preferred_element_type=jnp.float32)
    o_ref[...] = (acc + add_ref[...]).astype(o_ref.dtype)


def fused_patch_projection(patches_ext, w_pad, add_rows, *, tn, out_dtype):
    """patches_ext: [B, R_pad, Kp], w_pad: [Kp, E], add_rows: [R_pad, E]
    -> [B, R_pad, E] = patches_ext @ w_pad + add_rows (broadcast over B)."""
    B, R_pad, Kp = patches_ext.shape
    E = w_pad.shape[1]
    assert R_pad % tn == 0
    grid = (B, R_pad // tn)

    in_item = jnp.dtype(patches_ext.dtype).itemsize
    out_item = jnp.dtype(out_dtype).itemsize
    # 2x-buffered patch/add/out tiles + resident weight, with 2x headroom;
    # clamp so the request is also sane on v7x (64 MiB physical VMEM per TC).
    est = (2 * tn * Kp * in_item        # patch tile, double-buffered
           + 2 * tn * E * 4             # add tile (f32), double-buffered
           + 2 * tn * E * out_item      # out tile, double-buffered
           + 2 * Kp * E * in_item)      # weight
    vmem_limit = int(min(max(2 * est, 32 * 1024 * 1024), 100 * 1024 * 1024))

    return pl.pallas_call(
        _proj_kernel,
        out_shape=jax.ShapeDtypeStruct((B, R_pad, E), out_dtype),
        grid_spec=pltpu.PrefetchScalarGridSpec(
            num_scalar_prefetch=0,
            grid=grid,
            in_specs=[
                pl.BlockSpec((None, tn, Kp), lambda b, j: (b, j, 0)),
                pl.BlockSpec((Kp, E), lambda b, j: (0, 0)),
                pl.BlockSpec((tn, E), lambda b, j: (j, 0)),
            ],
            out_specs=pl.BlockSpec((None, tn, E), lambda b, j: (b, j, 0)),
        ),
        compiler_params=pltpu.CompilerParams(
            dimension_semantics=("parallel", "parallel"),
            vmem_limit_bytes=vmem_limit,
        ),
    )(patches_ext, w_pad, add_rows)


def patch_embedding_forward(x, params, *, patch_size,
                            compute_dtype=jnp.bfloat16, tile_rows=512):
    """x: [B, C, H, W] NCHW. Returns [B, N+1, E] (cls token + patches + pos emb)."""
    B, C, H, W = x.shape
    P = patch_size
    assert H % P == 0 and W % P == 0
    Hn, Wn = H // P, W // P
    N = Hn * Wn
    conv_w = params["conv_w"]            # [E, C, P, P]
    conv_b = params["conv_b"]            # [E]
    cls_token = params["cls_token"]      # [1, 1, E]
    pos_emb = params["pos_embeddings"]   # [1, N+1, E]
    E = conv_w.shape[0]
    K = C * P * P
    R = N + 1                            # cls row + N patch rows

    # Tile geometry: K padded to a 128-lane multiple; rows tiled by tn
    # (multiple of 8, up to tile_rows) and padded to a tile multiple.
    Kp = _round_up(K, 128)
    tn = min(tile_rows, _round_up(R, 8))
    tn = max(8, (tn // 8) * 8)
    R_pad = _round_up(R, tn)

    # Patch extraction glue: NCHW -> [B, N, K], channel-major patch flatten to
    # match the Conv2d weight layout (E, C, P, P) -> (E, K).
    # TODO(synk): this transpose is one extra HBM pass; an NHWC host layout (or
    # allow_input_fusion into the pallas_call input) would remove it.
    patches = x.reshape(B, C, Hn, P, Wn, P)
    patches = patches.transpose(0, 2, 4, 1, 3, 5).reshape(B, N, K)

    # Row 0 is a zero "cls slot" (its matmul contribution is 0; cls + pos[0]
    # arrive via add_rows). Rows N+1..R_pad-1 and lanes K..Kp-1 are zero pad.
    patches_ext = jnp.zeros((B, R_pad, Kp), compute_dtype)
    patches_ext = patches_ext.at[:, 1:N + 1, :K].set(patches.astype(compute_dtype))

    # Dense projection weight, zero-padded on K.
    w_mat = conv_w.reshape(E, K).T                                   # [K, E]
    w_pad = jnp.zeros((Kp, E), compute_dtype).at[:K, :].set(
        w_mat.astype(compute_dtype))

    # Fused per-row additive term (kept in f32 for accuracy):
    #   row 0      -> cls_token + pos[0]
    #   rows 1..N  -> conv bias + pos[1..N]
    pos = pos_emb[0].astype(jnp.float32)                             # [N+1, E]
    add_rows = jnp.zeros((R_pad, E), jnp.float32)
    add_rows = add_rows.at[0, :].set(cls_token[0, 0].astype(jnp.float32) + pos[0])
    add_rows = add_rows.at[1:N + 1, :].set(
        conv_b[None, :].astype(jnp.float32) + pos[1:])

    out_full = fused_patch_projection(patches_ext, w_pad, add_rows,
                                      tn=tn, out_dtype=x.dtype)      # [B, R_pad, E]
    return out_full[:, :R, :]                                        # [B, N+1, E]


def init_params(key, *, in_channels, patch_size, embed_dim, n_patches):
    k1, k2, k3, k4 = jax.random.split(key, 4)
    fan_in = in_channels * patch_size * patch_size
    bound = 1.0 / jnp.sqrt(fan_in)
    conv_w = jax.random.uniform(
        k1, (embed_dim, in_channels, patch_size, patch_size),
        minval=-bound, maxval=bound, dtype=jnp.float32)
    conv_b = jax.random.uniform(
        k2, (embed_dim,), minval=-bound, maxval=bound, dtype=jnp.float32)
    cls_token = jax.random.normal(k3, (1, 1, embed_dim), dtype=jnp.float32)
    pos_embeddings = jax.random.normal(
        k4, (1, n_patches + 1, embed_dim), dtype=jnp.float32)
    return dict(conv_w=conv_w, conv_b=conv_b,
                cls_token=cls_token, pos_embeddings=pos_embeddings)


def _reference_forward(x, params, *, patch_size):
    # Pure-JAX reference (lax conv) for correctness checks.
    out = jax.lax.conv_general_dilated(
        x, params["conv_w"],
        window_strides=(patch_size, patch_size), padding="VALID",
        dimension_numbers=("NCHW", "OIHW", "NCHW"))
    out = out + params["conv_b"][None, :, None, None]
    B, E, Hn, Wn = out.shape
    out = out.reshape(B, E, Hn * Wn).transpose(0, 2, 1)              # [B, N, E]
    cls = jnp.broadcast_to(params["cls_token"], (B, 1, E))
    out = jnp.concatenate([cls, out], axis=1) + params["pos_embeddings"]
    return out


if __name__ == "__main__":
    # Small shapes consistent with the module: B=2, C=3, size=16, P=4, E=128
    B, C, SIZE, PATCH, EMBED = 2, 3, 16, 4, 128
    N = (SIZE // PATCH) ** 2

    key = jax.random.PRNGKey(0)
    kx, kp = jax.random.split(key)
    x = jax.random.normal(kx, (B, C, SIZE, SIZE), dtype=jnp.float32)
    params = init_params(kp, in_channels=C, patch_size=PATCH,
                         embed_dim=EMBED, n_patches=N)

    ref = _reference_forward(x, params, patch_size=PATCH)

    # f32 compute path: strict check against the lax.conv reference.
    fwd_f32 = jax.jit(functools.partial(
        patch_embedding_forward, patch_size=PATCH, compute_dtype=jnp.float32))
    out_f32 = jax.block_until_ready(fwd_f32(x, params))
    assert out_f32.shape == (B, N + 1, EMBED), out_f32.shape
    assert jnp.allclose(out_f32, ref, atol=1e-4, rtol=1e-4), (
        float(jnp.max(jnp.abs(out_f32 - ref))))

    # bf16 operands + f32 accumulation (the recommended fast path on v6e/v7x):
    # looser tolerance since only the patch @ W product is bf16.
    fwd_bf16 = jax.jit(functools.partial(
        patch_embedding_forward, patch_size=PATCH, compute_dtype=jnp.bfloat16))
    out_bf16 = jax.block_until_ready(fwd_bf16(x, params))
    assert out_bf16.shape == (B, N + 1, EMBED), out_bf16.shape
    assert jnp.allclose(out_bf16, ref, atol=5e-2, rtol=5e-2), (
        float(jnp.max(jnp.abs(out_bf16 - ref))))

    print("KERNEL_OK")
</pallas_src>

<mosaic_0001>
module attributes {stable_mosaic.version = 11 : i64} {
  func.func @_proj_kernel(%arg0: i32, %arg1: i32, %arg2: memref<1x24x128xf32, #tpu.memory_space<vmem>>, %arg3: memref<128x128xf32, #tpu.memory_space<vmem>>, %arg4: memref<24x128xf32, #tpu.memory_space<vmem>>, %arg5: memref<1x24x128xf32, #tpu.memory_space<vmem>>) attributes {dimension_semantics = [#tpu.dimension_semantics<parallel>, #tpu.dimension_semantics<parallel>], iteration_bounds = array<i64: 2, 1>, scalar_prefetch = 0 : i64, scratch_operands = 0 : i64, tpu.core_type = #tpu.core_type<tc>, window_params = [{transform_indices = @transform_0, window_bounds = array<i64: 1, 24, 128>}, {pipeline_mode = #tpu.pipeline_mode<synchronous>, transform_indices = @transform_1, window_bounds = array<i64: 128, 128>}, {transform_indices = @transform_2, window_bounds = array<i64: 24, 128>}, {transform_indices = @transform_3, window_bounds = array<i64: 1, 24, 128>}]} {
    %c0 = arith.constant 0 : index
    %c0_0 = arith.constant 0 : index
    %c0_1 = arith.constant 0 : index
    %0 = vector.load %arg2[%c0, %c0_0, %c0_1] : memref<1x24x128xf32, #tpu.memory_space<vmem>>, vector<1x24x128xf32>
    %1 = vector.shape_cast %0 : vector<1x24x128xf32> to vector<24x128xf32>
    %c0_2 = arith.constant 0 : index
    %c0_3 = arith.constant 0 : index
    %2 = vector.load %arg3[%c0_2, %c0_3] : memref<128x128xf32, #tpu.memory_space<vmem>>, vector<128x128xf32>
    %cst = arith.constant dense<0.000000e+00> : vector<24x128xf32>
    %3 = tpu.matmul %1, %2, %cst {dimension_numbers = #tpu.dot_dimension_numbers<[1], [0], [0], [1], [0, 0, 1, 1], [], []>} : vector<24x128xf32>, vector<128x128xf32>, vector<24x128xf32> -> vector<24x128xf32>
    %c0_4 = arith.constant 0 : index
    %c0_5 = arith.constant 0 : index
    %4 = vector.load %arg4[%c0_4, %c0_5] : memref<24x128xf32, #tpu.memory_space<vmem>>, vector<24x128xf32>
    %5 = arith.addf %3, %4 : vector<24x128xf32>
    %c0_6 = arith.constant 0 : index
    %c0_7 = arith.constant 0 : index
    %c0_8 = arith.constant 0 : index
    %6 = vector.load %arg5[%c0_6, %c0_7, %c0_8] : memref<1x24x128xf32, #tpu.memory_space<vmem>>, vector<1x24x128xf32>
    %7 = vector.shape_cast %6 : vector<1x24x128xf32> to vector<24x128xf32>
    %8 = vector.shape_cast %5 : vector<24x128xf32> to vector<1x24x128xf32>
    tpu.vector_store %arg5[%c0_6, %c0_7, %c0_8], %8 {strides = array<i32>} : memref<1x24x128xf32, #tpu.memory_space<vmem>>, vector<1x24x128xf32>,
    return
  }
  func.func @transform_0(%arg0: i32, %arg1: i32) -> (i32, i32, i32) {
    %c0_i32 = arith.constant 0 : i32
    %c0_i32_0 = arith.constant 0 : i32
    return %arg0, %arg1, %c0_i32 : i32, i32, i32
  }
  func.func @transform_1(%arg0: i32, %arg1: i32) -> (i32, i32) {
    %c0_i32 = arith.constant 0 : i32
    %c0_i32_0 = arith.constant 0 : i32
    %c0_i32_1 = arith.constant 0 : i32
    return %c0_i32, %c0_i32_0 : i32, i32
  }
  func.func @transform_2(%arg0: i32, %arg1: i32) -> (i32, i32) {
    %c0_i32 = arith.constant 0 : i32
    %c0_i32_0 = arith.constant 0 : i32
    return %arg1, %c0_i32 : i32, i32
  }
  func.func @transform_3(%arg0: i32, %arg1: i32) -> (i32, i32, i32) {
    %c0_i32 = arith.constant 0 : i32
    %c0_i32_0 = arith.constant 0 : i32
    return %arg0, %arg1, %c0_i32 : i32, i32, i32
  }
}

</mosaic_0001>

<llo_original>
// kernel: patch_embedding_forward.1
$region0: #{patch_embedding_forward.1}
  #allocation0 [shape = 'u32[]', space=smem, size = 0x4, offset = 0x4, fixed_abs, tag = 'smem constant byte address 0x4 - core index']
  #allocation1 [shape = 'u32[144,128]{1,0:T(1,128)}', space=vmem, size = 0x12000, scoped, tag = 'internal scratch']
  %s0 = inlined_call_operand.vmem [shape: f32[2,24,128], index: 0, kind: input, shape index: {}]
  %s1 = inlined_call_operand.vmem [shape: f32[128,128], index: 1, kind: input, shape index: {}]
  %s2 = inlined_call_operand.vmem [shape: f32[24,128], index: 2, kind: input, shape index: {}]
  %s3 = inlined_call_operand.vmem [shape: f32[2,24,128], index: 3, kind: output, shape index: {}]
  %s4 = sld [smem:[#allocation0]]
  $region45: #{patch_embedding_forward.1} parent=0
    _
  %s6 = ssub.s32 1, %s4
  %s7 = scalar_select 0, %s6, %s4
  loop: start=0, step=1, limit=4
  $region2: #{patch_embedding_forward.1} parent=0 // loop_pre_header
    _
  $region3: #{patch_embedding_forward.1} parent=0 // loop_header
    %s9 = sphi 0, %s13
    %p10 = scmp.ge.s32.totalorder %s9, 4
    %s16 = sphi 0, %s28
    %s17 = sphi 0, %s24
    %s18 = sphi 0, %s16
    %s19 = sphi 0, %s17
    %s20 = sphi 0, %s18
    %s21 = sphi 0, %s19
    %s33 = sphi 0, %s35
    %s36 = sphi 0, %s33
    %s37 = sphi 0, %s36
    %s53 = sphi 0, %s37
    %s57 = sphi 0, %s57
    %s59 = sphi 0, %s57
    %s60 = sphi 0, %s59
    %s74 = sphi 0, %s60
    %s80 = sphi 0, %s82
    %s83 = sphi 0, %s80
    %s84 = sphi 0, %s83
    %s100 = sphi 0, %s84
    %s108 = sphi 0, %s110
    %s111 = sphi 0, %s108
    %s112 = sphi 0, %s111
    %s128 = sphi 0, %s112
  $region4: #{patch_embedding_forward.1} parent=0 // loop_header_branch
    %12 = sbr.rel (%p10) target = $region8
  $region5: #{patch_embedding_forward.1} parent=0 // loop_body
    %s14 = ssub.s32 %s9, 1
    %s15 = ssub.s32 %s9, 2
    %s22 = sadd.s32 1, %s17
    %p23 = scmp.ge.s32.totalorder %s22, 1
    %s24 = scalar_select %p23, 0, %s22
    %s25 = sadd.s32 1, %s16
    %s26 = scalar_select %p23, %s25, %s16
    %p27 = scmp.ge.s32.totalorder %s26, 2
    %s28 = scalar_select %p27, 0, %s26
    %s29 = ssub.s32 %s16, %s28
    %s30 = ssub.s32 %s17, %s24
    %s31 = sor.u32 %s29, %s30
    %p32 = scmp.eq.s32.totalorder %s31, 0
    %s34 = sadd.s32 %s33, 1
    %s35 = scalar_select %p32, %s33, %s34
    %p38 = pneg %p32
    %p39 = scmp.eq.s32.totalorder %s9, 1
    %p40 = por %p38, %p39
    %p41 = scmp.ne.s32.totalorder %s33, %s36
    %p42 = scmp.eq.s32.totalorder %s9, 0
    %p43 = por %p41, %p42
    %p44 = scmp.ne.s32.totalorder %s33, %s36
    %p45 = scmp.eq.s32.totalorder %s14, 1
    %p46 = por %p44, %p45
    %p47 = scmp.ne.s32.totalorder %s36, %s37
    %p48 = scmp.eq.s32.totalorder %s14, 0
    %p49 = por %p47, %p48
    %p50 = scmp.ne.s32.totalorder %s36, %s37
    %p51 = scmp.eq.s32.totalorder %s15, 1
    %p52 = por %p50, %p51
    %p54 = scmp.ne.s32.totalorder %s37, %s53
    %p55 = scmp.eq.s32.totalorder %s15, 0
    %p56 = por %p54, %p55
    %s58 = sadd.s32 %s57, 1
    %p61 = scmp.eq.s32.totalorder %s9, 1
    %p62 = scmp.ne.s32.totalorder %s57, %s59
    %p63 = scmp.eq.s32.totalorder %s9, 0
    %p64 = por %p62, %p63
    %p65 = scmp.ne.s32.totalorder %s57, %s59
    %p66 = scmp.eq.s32.totalorder %s14, 1
    %p67 = por %p65, %p66
    %p68 = scmp.ne.s32.totalorder %s59, %s60
    %p69 = scmp.eq.s32.totalorder %s14, 0
    %p70 = por %p68, %p69
    %p71 = scmp.ne.s32.totalorder %s59, %s60
    %p72 = scmp.eq.s32.totalorder %s15, 1
    %p73 = por %p71, %p72
    %p75 = scmp.ne.s32.totalorder %s60, %s74
    %p76 = scmp.eq.s32.totalorder %s15, 0
    %p77 = por %p75, %p76
    %s78 = ssub.s32 %s17, %s24
    %p79 = scmp.eq.s32.totalorder %s78, 0
    %s81 = sadd.s32 %s80, 1
    %s82 = scalar_select %p79, %s80, %s81
    %p85 = pneg %p79
    %p86 = scmp.eq.s32.totalorder %s9, 1
    %p87 = por %p85, %p86
    %p88 = scmp.ne.s32.totalorder %s80, %s83
    %p89 = scmp.eq.s32.totalorder %s9, 0
    %p90 = por %p88, %p89
    %p91 = scmp.ne.s32.totalorder %s80, %s83
    %p92 = scmp.eq.s32.totalorder %s14, 1
    %p93 = por %p91, %p92
    %p94 = scmp.ne.s32.totalorder %s83, %s84
    %p95 = scmp.eq.s32.totalorder %s14, 0
    %p96 = por %p94, %p95
    %p97 = scmp.ne.s32.totalorder %s83, %s84
    %p98 = scmp.eq.s32.totalorder %s15, 1
    %p99 = por %p97, %p98
    %p101 = scmp.ne.s32.totalorder %s84, %s100
    %p102 = scmp.eq.s32.totalorder %s15, 0
    %p103 = por %p101, %p102
    %s104 = ssub.s32 %s16, %s28
    %s105 = ssub.s32 %s17, %s24
    %s106 = sor.u32 %s104, %s105
    %p107 = scmp.eq.s32.totalorder %s106, 0
    %s109 = sadd.s32 %s108, 1
    %s110 = scalar_select %p107, %s108, %s109
    %p113 = pneg %p107
    %p114 = scmp.eq.s32.totalorder %s9, 1
    %p115 = por %p113, %p114
    %p116 = scmp.ne.s32.totalorder %s108, %s111
    %p117 = scmp.eq.s32.totalorder %s9, 0
    %p118 = por %p116, %p117
    %p119 = scmp.ne.s32.totalorder %s108, %s111
    %p120 = scmp.eq.s32.totalorder %s14, 1
    %p121 = por %p119, %p120
    %p122 = scmp.ne.s32.totalorder %s111, %s112
    %p123 = scmp.eq.s32.totalorder %s14, 0
    %p124 = por %p122, %p123
    %p125 = scmp.ne.s32.totalorder %s111, %s112
    %p126 = scmp.eq.s32.totalorder %s15, 1
    %p127 = por %p125, %p126
    %p129 = scmp.ne.s32.totalorder %s112, %s128
    %p130 = scmp.eq.s32.totalorder %s15, 0
    %p131 = por %p129, %p130
    %p132 = scmp.le.s32.totalorder 1, %s9
    %p133 = scmp.lt.s32.totalorder %s9, 3
    %p134 = pnand %p132, %p133
    %p135 = pneg %p134
    // Predicated region
    $region9: #{patch_embedding_forward.1} parent=5 // pred_check
      _
    $region10: #{patch_embedding_forward.1} parent=5 // pred_check_branch
      %137 = sbr.rel (%p134) target = $region12
    $region11: #{patch_embedding_forward.1} parent=5 // pred_region
      %s138 = ssub.s32 %s9, 1
      // Predicated region
      $region13: #{patch_embedding_forward.1} parent=11 // pred_check
        %p139 = pneg %p70
      $region14: #{patch_embedding_forward.1} parent=11 // pred_check_branch
        %141 = sbr.rel (%p139) target = $region16
      $region15: #{patch_embedding_forward.1} parent=11 // pred_region
        _
      $region16: #{patch_embedding_forward.1} parent=11 // pred_fallthru
        _
      // Predicated region
      $region17: #{patch_embedding_forward.1} parent=11 // pred_check
        %p142 = pneg %p96
      $region18: #{patch_embedding_forward.1} parent=11 // pred_check_branch
        %144 = sbr.rel (%p142) target = $region20
      $region19: #{patch_embedding_forward.1} parent=11 // pred_region
        %s145 = smul.u32 3, %s19
        %p146 = scmp.lt.s32.totalorder %s145, 2
        %s147 = scalar_select %p146, %s145, 2
        %s148 = smul.addr %s147, 8
        %s149 = scalar_lea.vmem %s2, %s148
        %s150 = smul.u32 3, %s19
      $region20: #{patch_embedding_forward.1} parent=11 // pred_fallthru
        _
    $region12: #{patch_embedding_forward.1} parent=5 // pred_fallthru
      _
    %p151 = scmp.lt.s32.totalorder %s9, 2
    // Predicated region
    $region21: #{patch_embedding_forward.1} parent=5 // pred_check
      %p152 = pneg %p151
    $region22: #{patch_embedding_forward.1} parent=5 // pred_check_branch
      %154 = sbr.rel (%p152) target = $region24
    $region23: #{patch_embedding_forward.1} parent=5 // pred_region
      // Predicated region
      $region25: #{patch_embedding_forward.1} parent=23 // pred_check
        %p155 = pneg %p43
      $region26: #{patch_embedding_forward.1} parent=23 // pred_check_branch
        %157 = sbr.rel (%p155) target = $region28
      $region27: #{patch_embedding_forward.1} parent=23 // pred_region
        %s158 = smul.u32 3, %s17
        %p159 = scmp.lt.s32.totalorder %s16, 1
        %s160 = scalar_select %p159, %s16, 1
        %p161 = scmp.lt.s32.totalorder %s158, 2
        %s162 = scalar_select %p161, %s158, 2
        %s163 = smul.addr %s160, 3
        %s164 = sadd.s32 %s162, %s163
        %s165 = smul.addr %s164, 8
        %s166 = scalar_lea.vmem %s0, %s165
        %s167 = smul.u32 3, %s17
      $region28: #{patch_embedding_forward.1} parent=23 // pred_fallthru
        _
    $region24: #{patch_embedding_forward.1} parent=5 // pred_fallthru
      _
    %p168 = scmp.le.s32.totalorder 1, %s9
    %p169 = scmp.lt.s32.totalorder %s9, 3
    %p170 = pnand %p168, %p169
    %p171 = pneg %p170
    // Predicated region
    $region29: #{patch_embedding_forward.1} parent=5 // pred_check
      _
    $region30: #{patch_embedding_forward.1} parent=5 // pred_check_branch
      %173 = sbr.rel (%p170) target = $region32
    $region31: #{patch_embedding_forward.1} parent=5 // pred_region
      %s174 = ssub.s32 %s9, 1
      %s175 = smul.u32 3, %s19
      %p176 = scmp.lt.s32.totalorder %s18, 1
      %s177 = scalar_select %p176, %s18, 1
      %p178 = scmp.lt.s32.totalorder %s175, 2
      %s179 = scalar_select %p178, %s175, 2
      %s180 = smul.addr %s177, 3
      %s181 = sadd.s32 %s179, %s180
      %s182 = smul.addr %s181, 8
      %s183 = scalar_lea.vmem %s0, %s182
      %p184 = pneg %p49
      %p185 = pneg %p46
      %p186 = pneg %p70
      %p187 = pneg %p67
      %s188 = smul.u32 3, %s19
      %p189 = scmp.lt.s32.totalorder %s188, 2
      %s190 = scalar_select %p189, %s188, 2
      %s191 = smul.addr %s190, 8
      %s192 = scalar_lea.vmem %s2, %s191
      %p193 = pneg %p96
      %p194 = pneg %p93
      %p195 = pneg %p124
      %p196 = pneg %p121
      %s197 = smul.u32 3, %s19
      %p198 = scmp.lt.s32.totalorder %s18, 1
      %s199 = scalar_select %p198, %s18, 1
      %p200 = scmp.lt.s32.totalorder %s197, 2
      %s201 = scalar_select %p200, %s197, 2
      %s202 = smul.addr %s199, 3
      %s203 = sadd.s32 %s201, %s202
      %s204 = smul.addr %s203, 8
      %s205 = scalar_lea.vmem %s3, %s204
      %s206 = smul.u32 3, %s19
      %p207 = scmp.lt.s32.totalorder %s18, 1
      %s208 = scalar_select %p207, %s18, 1
      %p209 = scmp.lt.s32.totalorder %s206, 2
      %s210 = scalar_select %p209, %s206, 2
      %s211 = smul.addr %s208, 3
      %s212 = sadd.s32 %s210, %s211
      %s213 = smul.addr %s212, 8
      %s214 = scalar_lea.vmem %s0, %s213
      %s215 = smul.u32 3, %s19
      %s216 = smul.u32 3, %s19
      %p217 = scmp.lt.s32.totalorder %s216, 2
      %s218 = scalar_select %p217, %s216, 2
      %s219 = smul.addr %s218, 8
      %s220 = scalar_lea.vmem %s2, %s219
      %s221 = smul.u32 3, %s19
      %s222 = smul.u32 3, %s19
      %p223 = scmp.lt.s32.totalorder %s18, 1
      %s224 = scalar_select %p223, %s18, 1
      %p225 = scmp.lt.s32.totalorder %s222, 2
      %s226 = scalar_select %p225, %s222, 2
      %s227 = smul.addr %s224, 3
      %s228 = sadd.s32 %s226, %s227
      %s229 = smul.addr %s228, 8
      %s230 = scalar_lea.vmem %s3, %s229
      %s231 = smul.u32 3, %s19
      %v232 = vld [vmem:[%s214] sm:$0xff]
      %v233 = vld [vmem:[%s214 + $0x8] sm:$0xff]
      %v234 = vld [vmem:[%s214 + $0x10] sm:$0xff]
      %v235 = vld [vmem:[%s1] sm:$0xff]
      %v236 = vld [vmem:[%s1 + $0x8] sm:$0xff]
      %v237 = vld [vmem:[%s1 + $0x10] sm:$0xff]
      %v238 = vld [vmem:[%s1 + $0x18] sm:$0xff]
      %v239 = vld [vmem:[%s1 + $0x20] sm:$0xff]
      %v240 = vld [vmem:[%s1 + $0x28] sm:$0xff]
      %v241 = vld [vmem:[%s1 + $0x30] sm:$0xff]
      %v242 = vld [vmem:[%s1 + $0x38] sm:$0xff]
      %v243 = vld [vmem:[%s1 + $0x40] sm:$0xff]
      %v244 = vld [vmem:[%s1 + $0x48] sm:$0xff]
      %v245 = vld [vmem:[%s1 + $0x50] sm:$0xff]
      %v246 = vld [vmem:[%s1 + $0x58] sm:$0xff]
      %v247 = vld [vmem:[%s1 + $0x60] sm:$0xff]
      %v248 = vld [vmem:[%s1 + $0x68] sm:$0xff]
      %v249 = vld [vmem:[%s1 + $0x70] sm:$0xff]
      %v250 = vld [vmem:[%s1 + $0x78] sm:$0xff]
      %v251 = vld [vmem:[%s220] sm:$0xff]
      %v252 = vld [vmem:[%s220 + $0x8] sm:$0xff]
      %v253 = vld [vmem:[%s220 + $0x10] sm:$0xff]
      %254 = vmatprep.subr.mxu0 0.0
      %255 = vmatpush1.msra.mxu0 %v250
      %256 = vmatprep.subr.mxu0 0.0
      %257 = vmatpush1.msra.mxu0 %v249
      %258 = vmatprep.subr.mxu0 0.0
      %259 = vmatpush1.msra.mxu0 %v248
      %260 = vmatprep.subr.mxu0 0.0
      %261 = vmatpush1.msra.mxu0 %v247
      %262 = vmatprep.subr.mxu0 0.0
      %263 = vmatpush1.msra.mxu0 %v246
      %264 = vmatprep.subr.mxu0 0.0
      %265 = vmatpush1.msra.mxu0 %v245
      %266 = vmatprep.subr.mxu0 0.0
      %267 = vmatpush1.msra.mxu0 %v244
      %268 = vmatprep.subr.mxu0 0.0
      %269 = vmatpush1.msra.mxu0 %v243
      %270 = vmatprep.subr.mxu0 0.0
      %271 = vmatpush1.msra.mxu0 %v242
      %272 = vmatprep.subr.mxu0 0.0
      %273 = vmatpush1.msra.mxu0 %v241
      %274 = vmatprep.subr.mxu0 0.0
      %275 = vmatpush1.msra.mxu0 %v240
      %276 = vmatprep.subr.mxu0 0.0
      %277 = vmatpush1.msra.mxu0 %v239
      %278 = vmatprep.subr.mxu0 0.0
      %279 = vmatpush1.msra.mxu0 %v238
      %280 = vmatprep.subr.mxu0 0.0
      %281 = vmatpush1.msra.mxu0 %v237
      %282 = vmatprep.subr.mxu0 0.0
      %283 = vmatpush1.msra.mxu0 %v236
      %284 = vmatprep.subr.mxu0 0.0
      %285 = vmatpush1.msra.mxu0 %v235
      %286 = vmatprep.subr.mxu0 0.0
      %287 = vmatpush2.msra.mxu0 0.0
      %288 = vmatprep.subr.mxu0 0.0
      %289 = vmatpush2.msra.mxu0 0.0
      %290 = vmatprep.subr.mxu0 0.0
      %291 = vmatpush2.msra.mxu0 0.0
      %292 = vmatprep.subr.mxu0 0.0
      %293 = vmatpush2.msra.mxu0 0.0
      %294 = vmatprep.subr.mxu0 0.0
      %295 = vmatpush2.msra.mxu0 0.0
      %296 = vmatprep.subr.mxu0 0.0
      %297 = vmatpush2.msra.mxu0 0.0
      %298 = vmatprep.subr.mxu0 0.0
      %299 = vmatpush2.msra.mxu0 0.0
      %300 = vmatprep.subr.mxu0 0.0
      %301 = vmatpush2.msra.mxu0 0.0
      %302 = vmatprep.subr.mxu0 0.0
      %303 = vmatpush2.msra.mxu0 0.0
      %304 = vmatprep.subr.mxu0 0.0
      %305 = vmatpush2.msra.mxu0 0.0
      %306 = vmatprep.subr.mxu0 0.0
      %307 = vmatpush2.msra.mxu0 0.0
      %308 = vmatprep.subr.mxu0 0.0
      %309 = vmatpush2.msra.mxu0 0.0
      %310 = vmatprep.subr.mxu0 0.0
      %311 = vmatpush2.msra.mxu0 0.0
      %312 = vmatprep.subr.mxu0 0.0
      %313 = vmatpush2.msra.mxu0 0.0
      %314 = vmatprep.subr.mxu0 0.0
      %315 = vmatpush2.msra.mxu0 0.0
      %316 = vmatprep.subr.mxu0 0.0
      %317 = vmatpush2.msra.mxu0 0.0
      %318 = vmatprep.mubr.f32.mxu0 0.0
      %319 = vmatmul.mubr.f32.gmra.mxu0 %v232
      %v320 = vpop.f32.mrf.mxu0
      %v321 = vadd.f32 %v251, %v320
      %v322 = vpop.f32.mrf.mxu0
      %323 = vmatprep.mubr.f32.mxu0 0.0
      %324 = vmatmul.mubr.f32.gmra.mxu0 %v233
      %v325 = vpop.f32.mrf.mxu0
      %v326 = vadd.f32 %v252, %v325
      %v327 = vpop.f32.mrf.mxu0
      %328 = vmatprep.mubr.f32.mxu0 0.0
      %329 = vmatmul.mubr.f32.gmra.mxu0 %v234
      %v330 = vpop.f32.mrf.mxu0
      %v331 = vadd.f32 %v253, %v330
      %v332 = vpop.f32.mrf.mxu0
      %333 = vdwg.mxu0
      %334 = vst [vmem:[%s230] sm:$0xff] %v321
      %335 = vst [vmem:[%s230 + $0x8] sm:$0xff] %v326
      %336 = vst [vmem:[%s230 + $0x10] sm:$0xff] %v331
      %s337 = smul.u32 3, %s19
      %p338 = scmp.lt.s32.totalorder %s18, 1
      %s339 = scalar_select %p338, %s18, 1
      %p340 = scmp.lt.s32.totalorder %s337, 2
      %s341 = scalar_select %p340, %s337, 2
      %s342 = smul.addr %s339, 3
      %s343 = sadd.s32 %s341, %s342
      %s344 = smul.addr %s343, 8
      %s345 = scalar_lea.vmem %s3, %s344
      // Predicated region
      $region33: #{patch_embedding_forward.1} parent=31 // pred_check
        %p346 = pneg %p121
      $region34: #{patch_embedding_forward.1} parent=31 // pred_check_branch
        %348 = sbr.rel (%p346) target = $region36
      $region35: #{patch_embedding_forward.1} parent=31 // pred_region
        %s349 = smul.u32 3, %s19
      $region36: #{patch_embedding_forward.1} parent=31 // pred_fallthru
        _
    $region32: #{patch_embedding_forward.1} parent=5 // pred_fallthru
      _
    %p350 = scmp.le.s32.totalorder 2, %s9
    // Predicated region
    $region37: #{patch_embedding_forward.1} parent=5 // pred_check
      %p351 = pneg %p350
    $region38: #{patch_embedding_forward.1} parent=5 // pred_check_branch
      %353 = sbr.rel (%p351) target = $region40
    $region39: #{patch_embedding_forward.1} parent=5 // pred_region
      %s354 = ssub.s32 %s9, 2
      // Predicated region
      $region41: #{patch_embedding_forward.1} parent=39 // pred_check
        %p355 = pneg %p127
      $region42: #{patch_embedding_forward.1} parent=39 // pred_check_branch
        %357 = sbr.rel (%p355) target = $region44
      $region43: #{patch_embedding_forward.1} parent=39 // pred_region
        %s358 = smul.u32 3, %s21
        %p359 = scmp.lt.s32.totalorder %s20, 1
        %s360 = scalar_select %p359, %s20, 1
        %p361 = scmp.lt.s32.totalorder %s358, 2
        %s362 = scalar_select %p361, %s358, 2
        %s363 = smul.addr %s360, 3
        %s364 = sadd.s32 %s362, %s363
        %s365 = smul.addr %s364, 8
        %s366 = scalar_lea.vmem %s3, %s365
      $region44: #{patch_embedding_forward.1} parent=39 // pred_fallthru
        _
    $region40: #{patch_embedding_forward.1} parent=5 // pred_fallthru
      _
  $region6: #{patch_embedding_forward.1} parent=0 // loop_footer
    %s13 = sadd.s32 1, %s9
  $region7: #{patch_embedding_forward.1} parent=0 // loop_footer_branch
    %8 = sbr.rel target = $region3
  $region8: #{patch_embedding_forward.1} parent=0 // loop_exit
    _

</llo_original>
